<compile_context>
chip_gen: v7x
topology: tpu7x:2x2x1
jax: 0.10.0
libtpu: 0.0.40
codegen_flags: <defaults>
</compile_context>

<pallas_src>
import functools

import jax
import jax.numpy as jnp
from jax.experimental import pallas as pl
from jax.experimental.pallas import tpu as pltpu

LANE = 128            # lane width (last dim)
TILE_ROWS = 2048      # rows per grid step: (2048, 128) f32 = 1 MiB per buffer
STRIP = 64            # strip-mined inner chunk: (64, 128) f32 = 8 vregs
NSTRIPS = TILE_ROWS // STRIP
NUM_SLICES = 2        # leading "parallel" grid axis -> both TensorCores on v7x


def _strip_compute(x, t):
    """Stable sigmoid + BCE-with-logits on one (STRIP, LANE) f32 strip.

    Clamping the logits to [-100, 100] reproduces torch's
    F.binary_cross_entropy(-100 log clamp) semantics to f32 precision.
    3 EUP transcendentals / element, no divide, no (1-t) blend.
    """
    xc = jnp.clip(x, -100.0, 100.0)
    e = jnp.exp(-jnp.abs(xc))            # in (0, 1], never overflows
    lse = jnp.log(1.0 + e)               # log(1 + exp(-|xc|))
    mx = jnp.maximum(xc, 0.0)
    bce = mx - xc * t + lse              # == -(t*log p + (1-t)*log(1-p))
    p = jnp.exp((xc - mx) - lse)         # sigmoid(xc);  min(xc,0) = xc - mx
    return p, bce


def _fold(v):
    # (STRIP, LANE) -> (8, LANE) with pure vreg-wise VPU adds (no XLU)
    return v.reshape(-1, 8, LANE).sum(axis=0)


def _dice_bce_kernel(x_ref, t_ref, acc_ref, *, nblocks, blocks_per_slice,
                     valid_in_last, has_phantom):
    c = pl.program_id(0)                 # slice / core index   (parallel)
    i = pl.program_id(1)                 # block within a slice (sequential)
    blk = c * blocks_per_slice + i

    # zero this slice's resident accumulator on its first block
    @pl.when(i == 0)
    def _():
        acc_ref[...] = jnp.zeros_like(acc_ref)

    def accumulate(valid_rows):
        # valid_rows: None (all TILE_ROWS rows valid) or python int < TILE_ROWS
        a_pt = jnp.zeros((8, LANE), jnp.float32)
        a_p = jnp.zeros((8, LANE), jnp.float32)
        a_t = jnp.zeros((8, LANE), jnp.float32)
        a_b = jnp.zeros((8, LANE), jnp.float32)
        for s in range(NSTRIPS):
            r0 = s * STRIP
            if valid_rows is not None and r0 >= valid_rows:
                break                    # strip entirely past the ragged edge
            x = x_ref[pl.ds(r0, STRIP), :].astype(jnp.float32)
            t = t_ref[pl.ds(r0, STRIP), :].astype(jnp.float32)
            p, bce = _strip_compute(x, t)
            if valid_rows is not None and r0 + STRIP > valid_rows:
                # partially-valid strip: zero contributions past the edge
                rid = jax.lax.broadcasted_iota(jnp.int32, (STRIP, LANE), 0)
                m = rid < (valid_rows - r0)
                zero = jnp.zeros_like(p)
                p = jnp.where(m, p, zero)
                t = jnp.where(m, t, zero)
                bce = jnp.where(m, bce, zero)
            a_pt += _fold(p * t)
            a_p += _fold(p)
            a_t += _fold(t)
            a_b += _fold(bce)
        acc_ref[0] += a_pt
        acc_ref[1] += a_p
        acc_ref[2] += a_t
        acc_ref[3] += a_b

    last_partial = valid_in_last < TILE_ROWS
    full_blocks = nblocks - 1 if last_partial else nblocks

    if full_blocks > 0:
        if last_partial or has_phantom:
            @pl.when(blk < full_blocks)
            def _():
                accumulate(None)
        else:
            accumulate(None)

    if last_partial:
        @pl.when(blk == nblocks - 1)
        def _():
            accumulate(valid_in_last)
    # blocks with blk >= nblocks (phantom tiles when the block count is odd)
    # skip all compute; their DMA index is clamped in `in_map` in the wrapper.


def dice_bce_loss(inputs, targets, smooth=1.0):
    """Pallas implementation of DiceBCELoss.forward (returns a scalar)."""
    x = jnp.ravel(inputs)    # keep native dtype; kernel casts per strip
    t = jnp.ravel(targets)
    total = x.shape[0]

    rows = total // LANE
    rem = total - rows * LANE

    # <128-element remainder handled in plain JAX: no full-array pad copy for
    # unaligned shapes; lane-aligned inputs take the no-copy reshape path.
    if rem:
        xr = x[rows * LANE:].astype(jnp.float32)
        tr = t[rows * LANE:].astype(jnp.float32)
        xc = jnp.clip(xr, -100.0, 100.0)
        lse = jnp.log(1.0 + jnp.exp(-jnp.abs(xc)))
        mx = jnp.maximum(xc, 0.0)
        pr = jnp.exp((xc - mx) - lse)
        bce_r = mx - xc * tr + lse
        rem_sums = jnp.stack(
            [jnp.sum(pr * tr), jnp.sum(pr), jnp.sum(tr), jnp.sum(bce_r)])
    else:
        rem_sums = jnp.zeros((4,), jnp.float32)

    if rows > 0:
        if rem:
            x2 = x[: rows * LANE].reshape(rows, LANE)
            t2 = t[: rows * LANE].reshape(rows, LANE)
        else:
            x2 = x.reshape(rows, LANE)
            t2 = t.reshape(rows, LANE)

        nblocks = pl.cdiv(rows, TILE_ROWS)
        blocks_per_slice = pl.cdiv(nblocks, NUM_SLICES)
        has_phantom = NUM_SLICES * blocks_per_slice > nblocks
        valid_in_last = rows - (nblocks - 1) * TILE_ROWS

        def in_map(c, i):
            # clamp so phantom blocks still map to a valid (already-read) DMA
            return (jnp.minimum(c * blocks_per_slice + i, nblocks - 1), 0)

        kernel = functools.partial(
            _dice_bce_kernel,
            nblocks=nblocks,
            blocks_per_slice=blocks_per_slice,
            valid_in_last=valid_in_last,
            has_phantom=has_phantom,
        )

        partials = pl.pallas_call(
            kernel,
            out_shape=jax.ShapeDtypeStruct((NUM_SLICES, 4, 8, LANE),
                                           jnp.float32),
            grid_spec=pltpu.PrefetchScalarGridSpec(
                num_scalar_prefetch=0,
                grid=(NUM_SLICES, blocks_per_slice),
                in_specs=[
                    pl.BlockSpec((TILE_ROWS, LANE), in_map),
                    pl.BlockSpec((TILE_ROWS, LANE), in_map),
                ],
                out_specs=pl.BlockSpec((None, 4, 8, LANE),
                                       lambda c, i: (c, 0, 0, 0)),
            ),
            compiler_params=pltpu.CompilerParams(
                dimension_semantics=("parallel", "arbitrary"),
            ),
        )(x2, t2)
        sums = jnp.sum(partials, axis=(0, 2, 3)) + rem_sums
    else:
        sums = rem_sums

    intersection, sum_p, sum_t, sum_bce = sums[0], sums[1], sums[2], sums[3]
    dice_loss = 1.0 - (2.0 * intersection + smooth) / (sum_p + sum_t + smooth)
    bce_mean = sum_bce / jnp.float32(total)
    return bce_mean + dice_loss


def _reference_dice_bce(inputs, targets, smooth=1.0):
    p = jax.nn.sigmoid(inputs.astype(jnp.float32)).ravel()
    t = targets.astype(jnp.float32).ravel()
    intersection = jnp.sum(p * t)
    dice = 1.0 - (2.0 * intersection + smooth) / (jnp.sum(p) + jnp.sum(t) + smooth)
    log_p = jnp.maximum(jnp.log(p), -100.0)
    log_1mp = jnp.maximum(jnp.log(1.0 - p), -100.0)
    bce = jnp.mean(-(t * log_p + (1.0 - t) * log_1mp))
    return bce + dice


if __name__ == "__main__":
    key = jax.random.PRNGKey(0)
    k1, k2, k3, k4 = jax.random.split(key, 4)

    loss_fn = jax.jit(functools.partial(dice_bce_loss, smooth=1.0))

    # NCHW, as a UNet segmentation head would produce; the loss flattens all.
    x = jax.random.normal(k1, (2, 4, 16, 16), dtype=jnp.float32)
    targets = (jax.random.uniform(k2, (2, 4, 16, 16)) > 0.5).astype(jnp.float32)
    loss = loss_fn(x, targets)
    jax.block_until_ready(loss)
    ref = _reference_dice_bce(x, targets, smooth=1.0)
    assert jnp.allclose(loss, ref, atol=1e-5, rtol=1e-5), (loss, ref)

    # un-aligned shape: exercises the partial-tile mask + plain-JAX remainder
    x_u = jax.random.normal(k3, (2, 3, 40, 41), dtype=jnp.float32)
    targets_u = (jax.random.uniform(k4, (2, 3, 40, 41)) > 0.5).astype(jnp.float32)
    loss_u = loss_fn(x_u, targets_u)
    jax.block_until_ready(loss_u)
    ref_u = _reference_dice_bce(x_u, targets_u, smooth=1.0)
    assert jnp.allclose(loss_u, ref_u, atol=1e-5, rtol=1e-5), (loss_u, ref_u)

    print("KERNEL_OK")
</pallas_src>

<mosaic_0001>
module attributes {stable_mosaic.version = 11 : i64} {
  func.func @_dice_bce_kernel(%arg0: i32, %arg1: i32, %arg2: memref<2048x128xf32, #tpu.memory_space<vmem>>, %arg3: memref<2048x128xf32, #tpu.memory_space<vmem>>, %arg4: memref<1x4x8x128xf32, #tpu.memory_space<vmem>>) attributes {dimension_semantics = [#tpu.dimension_semantics<parallel>, #tpu.dimension_semantics<arbitrary>], iteration_bounds = array<i64: 2, 1>, scalar_prefetch = 0 : i64, scratch_operands = 0 : i64, tpu.core_type = #tpu.core_type<tc>, window_params = [{transform_indices = @transform_0, window_bounds = array<i64: 2048, 128>}, {transform_indices = @transform_1, window_bounds = array<i64: 2048, 128>}, {transform_indices = @transform_2, window_bounds = array<i64: 1, 4, 8, 128>}]} {
    %c1_i32 = arith.constant 1 : i32
    %0 = arith.muli %arg0, %c1_i32 : i32
    %1 = arith.addi %0, %arg1 : i32
    %c0_i32 = arith.constant 0 : i32
    %2 = arith.cmpi eq, %arg1, %c0_i32 : i32
    %3 = arith.extui %2 : i1 to i32
    %c0_i32_0 = arith.constant 0 : i32
    %4 = arith.cmpi ne, %3, %c0_i32_0 : i32
    scf.if %4 {
      %cst = arith.constant 0.000000e+00 : f32
      %8 = vector.broadcast %cst : f32 to vector<4x8x128xf32>
      %c0 = arith.constant 0 : index
      %c0_3 = arith.constant 0 : index
      %c0_4 = arith.constant 0 : index
      %c0_5 = arith.constant 0 : index
      %9 = vector.load %arg4[%c0, %c0_3, %c0_4, %c0_5] : memref<1x4x8x128xf32, #tpu.memory_space<vmem>>, vector<1x4x8x128xf32>
      %10 = vector.shape_cast %9 : vector<1x4x8x128xf32> to vector<4x8x128xf32>
      %11 = vector.shape_cast %8 : vector<4x8x128xf32> to vector<1x4x8x128xf32>
      tpu.vector_store %arg4[%c0, %c0_3, %c0_4, %c0_5], %11 {strides = array<i32>} : memref<1x4x8x128xf32, #tpu.memory_space<vmem>>, vector<1x4x8x128xf32>,
    } else {
    }
    %c0_i32_1 = arith.constant 0 : i32
    %5 = arith.cmpi eq, %1, %c0_i32_1 : i32
    %6 = arith.extui %5 : i1 to i32
    %c0_i32_2 = arith.constant 0 : i32
    %7 = arith.cmpi ne, %6, %c0_i32_2 : i32
    scf.if %7 {
      %cst = arith.constant 0.000000e+00 : f32
      %8 = vector.broadcast %cst : f32 to vector<8x128xf32>
      %cst_3 = arith.constant 0.000000e+00 : f32
      %9 = vector.broadcast %cst_3 : f32 to vector<8x128xf32>
      %cst_4 = arith.constant 0.000000e+00 : f32
      %10 = vector.broadcast %cst_4 : f32 to vector<8x128xf32>
      %cst_5 = arith.constant 0.000000e+00 : f32
      %11 = vector.broadcast %cst_5 : f32 to vector<8x128xf32>
      %c0 = arith.constant 0 : index
      %c0_6 = arith.constant 0 : index
      %12 = vector.load %arg2[%c0, %c0_6] : memref<2048x128xf32, #tpu.memory_space<vmem>>, vector<64x128xf32>
      %c0_7 = arith.constant 0 : index
      %c0_8 = arith.constant 0 : index
      %13 = vector.load %arg3[%c0_7, %c0_8] : memref<2048x128xf32, #tpu.memory_space<vmem>>, vector<64x128xf32>
      %cst_9 = arith.constant -1.000000e+02 : f32
      %cst_10 = arith.constant 1.000000e+02 : f32
      %14 = vector.broadcast %cst_9 : f32 to vector<64x128xf32>
      %15 = arith.maximumf %14, %12 : vector<64x128xf32>
      %16 = vector.broadcast %cst_10 : f32 to vector<64x128xf32>
      %17 = arith.minimumf %16, %15 : vector<64x128xf32>
      %18 = math.absf %17 : vector<64x128xf32>
      %cst_11 = arith.constant 0.000000e+00 : f32
      %19 = vector.broadcast %cst_11 : f32 to vector<64x128xf32>
      %20 = arith.subf %19, %18 : vector<64x128xf32>
      %21 = math.exp %20 : vector<64x128xf32>
      %cst_12 = arith.constant 1.000000e+00 : f32
      %22 = vector.broadcast %cst_12 : f32 to vector<64x128xf32>
      %23 = arith.addf %22, %21 : vector<64x128xf32>
      %24 = math.log %23 : vector<64x128xf32>
      %cst_13 = arith.constant 0.000000e+00 : f32
      %25 = vector.broadcast %cst_13 : f32 to vector<64x128xf32>
      %26 = arith.maximumf %17, %25 : vector<64x128xf32>
      %27 = arith.mulf %17, %13 : vector<64x128xf32>
      %28 = arith.subf %26, %27 : vector<64x128xf32>
      %29 = arith.addf %28, %24 : vector<64x128xf32>
      %30 = arith.subf %17, %26 : vector<64x128xf32>
      %31 = arith.subf %30, %24 : vector<64x128xf32>
      %32 = math.exp %31 : vector<64x128xf32>
      %33 = tpu.iota {dimensions = array<i32: 0>} : vector<64x128xi32>
      %c16_i32 = arith.constant 16 : i32
      %34 = vector.broadcast %c16_i32 : i32 to vector<64x128xi32>
      %35 = arith.cmpi slt, %33, %34 : vector<64x128xi32>
      %cst_14 = arith.constant 0.000000e+00 : f32
      %36 = vector.broadcast %cst_14 : f32 to vector<64x128xf32>
      %37 = arith.select %35, %32, %36 : vector<64x128xi1>, vector<64x128xf32>
      %38 = arith.select %35, %13, %36 : vector<64x128xi1>, vector<64x128xf32>
      %39 = arith.select %35, %29, %36 : vector<64x128xi1>, vector<64x128xf32>
      %40 = arith.mulf %37, %38 : vector<64x128xf32>
      %41 = vector.shape_cast %40 : vector<64x128xf32> to vector<8x8x128xf32>
      %cst_15 = arith.constant dense<0.000000e+00> : vector<8x128xf32>
      %42 = vector.multi_reduction <add>, %41, %cst_15 [0] : vector<8x8x128xf32> to vector<8x128xf32>
      %43 = arith.addf %8, %42 : vector<8x128xf32>
      %44 = vector.shape_cast %37 : vector<64x128xf32> to vector<8x8x128xf32>
      %cst_16 = arith.constant dense<0.000000e+00> : vector<8x128xf32>
      %45 = vector.multi_reduction <add>, %44, %cst_16 [0] : vector<8x8x128xf32> to vector<8x128xf32>
      %46 = arith.addf %9, %45 : vector<8x128xf32>
      %47 = vector.shape_cast %38 : vector<64x128xf32> to vector<8x8x128xf32>
      %cst_17 = arith.constant dense<0.000000e+00> : vector<8x128xf32>
      %48 = vector.multi_reduction <add>, %47, %cst_17 [0] : vector<8x8x128xf32> to vector<8x128xf32>
      %49 = arith.addf %10, %48 : vector<8x128xf32>
      %50 = vector.shape_cast %39 : vector<64x128xf32> to vector<8x8x128xf32>
      %cst_18 = arith.constant dense<0.000000e+00> : vector<8x128xf32>
      %51 = vector.multi_reduction <add>, %50, %cst_18 [0] : vector<8x8x128xf32> to vector<8x128xf32>
      %52 = arith.addf %11, %51 : vector<8x128xf32>
      %c0_19 = arith.constant 0 : index
      %c0_20 = arith.constant 0 : index
      %c0_21 = arith.constant 0 : index
      %c0_22 = arith.constant 0 : index
      %53 = vector.load %arg4[%c0_19, %c0_20, %c0_21, %c0_22] : memref<1x4x8x128xf32, #tpu.memory_space<vmem>>, vector<1x1x8x128xf32>
      %54 = vector.shape_cast %53 : vector<1x1x8x128xf32> to vector<8x128xf32>
      %55 = arith.addf %54, %43 : vector<8x128xf32>
      %c0_23 = arith.constant 0 : index
      %c0_24 = arith.constant 0 : index
      %c0_25 = arith.constant 0 : index
      %c0_26 = arith.constant 0 : index
      %56 = vector.load %arg4[%c0_23, %c0_24, %c0_25, %c0_26] : memref<1x4x8x128xf32, #tpu.memory_space<vmem>>, vector<1x1x8x128xf32>
      %57 = vector.shape_cast %56 : vector<1x1x8x128xf32> to vector<8x128xf32>
      %58 = vector.shape_cast %55 : vector<8x128xf32> to vector<1x1x8x128xf32>
      tpu.vector_store %arg4[%c0_23, %c0_24, %c0_25, %c0_26], %58 {strides = array<i32>} : memref<1x4x8x128xf32, #tpu.memory_space<vmem>>, vector<1x1x8x128xf32>,
      %c0_27 = arith.constant 0 : index
      %c1 = arith.constant 1 : index
      %c0_28 = arith.constant 0 : index
      %c0_29 = arith.constant 0 : index
      %59 = vector.load %arg4[%c0_27, %c1, %c0_28, %c0_29] : memref<1x4x8x128xf32, #tpu.memory_space<vmem>>, vector<1x1x8x128xf32>
      %60 = vector.shape_cast %59 : vector<1x1x8x128xf32> to vector<8x128xf32>
      %61 = arith.addf %60, %46 : vector<8x128xf32>
      %c0_30 = arith.constant 0 : index
      %c1_31 = arith.constant 1 : index
      %c0_32 = arith.constant 0 : index
      %c0_33 = arith.constant 0 : index
      %62 = vector.load %arg4[%c0_30, %c1_31, %c0_32, %c0_33] : memref<1x4x8x128xf32, #tpu.memory_space<vmem>>, vector<1x1x8x128xf32>
      %63 = vector.shape_cast %62 : vector<1x1x8x128xf32> to vector<8x128xf32>
      %64 = vector.shape_cast %61 : vector<8x128xf32> to vector<1x1x8x128xf32>
      tpu.vector_store %arg4[%c0_30, %c1_31, %c0_32, %c0_33], %64 {strides = array<i32>} : memref<1x4x8x128xf32, #tpu.memory_space<vmem>>, vector<1x1x8x128xf32>,
      %c0_34 = arith.constant 0 : index
      %c2 = arith.constant 2 : index
      %c0_35 = arith.constant 0 : index
      %c0_36 = arith.constant 0 : index
      %65 = vector.load %arg4[%c0_34, %c2, %c0_35, %c0_36] : memref<1x4x8x128xf32, #tpu.memory_space<vmem>>, vector<1x1x8x128xf32>
      %66 = vector.shape_cast %65 : vector<1x1x8x128xf32> to vector<8x128xf32>
      %67 = arith.addf %66, %49 : vector<8x128xf32>
      %c0_37 = arith.constant 0 : index
      %c2_38 = arith.constant 2 : index
      %c0_39 = arith.constant 0 : index
      %c0_40 = arith.constant 0 : index
      %68 = vector.load %arg4[%c0_37, %c2_38, %c0_39, %c0_40] : memref<1x4x8x128xf32, #tpu.memory_space<vmem>>, vector<1x1x8x128xf32>
      %69 = vector.shape_cast %68 : vector<1x1x8x128xf32> to vector<8x128xf32>
      %70 = vector.shape_cast %67 : vector<8x128xf32> to vector<1x1x8x128xf32>
      tpu.vector_store %arg4[%c0_37, %c2_38, %c0_39, %c0_40], %70 {strides = array<i32>} : memref<1x4x8x128xf32, #tpu.memory_space<vmem>>, vector<1x1x8x128xf32>,
      %c0_41 = arith.constant 0 : index
      %c3 = arith.constant 3 : index
      %c0_42 = arith.constant 0 : index
      %c0_43 = arith.constant 0 : index
      %71 = vector.load %arg4[%c0_41, %c3, %c0_42, %c0_43] : memref<1x4x8x128xf32, #tpu.memory_space<vmem>>, vector<1x1x8x128xf32>
      %72 = vector.shape_cast %71 : vector<1x1x8x128xf32> to vector<8x128xf32>
      %73 = arith.addf %72, %52 : vector<8x128xf32>
      %c0_44 = arith.constant 0 : index
      %c3_45 = arith.constant 3 : index
      %c0_46 = arith.constant 0 : index
      %c0_47 = arith.constant 0 : index
      %74 = vector.load %arg4[%c0_44, %c3_45, %c0_46, %c0_47] : memref<1x4x8x128xf32, #tpu.memory_space<vmem>>, vector<1x1x8x128xf32>
      %75 = vector.shape_cast %74 : vector<1x1x8x128xf32> to vector<8x128xf32>
      %76 = vector.shape_cast %73 : vector<8x128xf32> to vector<1x1x8x128xf32>
      tpu.vector_store %arg4[%c0_44, %c3_45, %c0_46, %c0_47], %76 {strides = array<i32>} : memref<1x4x8x128xf32, #tpu.memory_space<vmem>>, vector<1x1x8x128xf32>,
    } else {
    }
    return
  }
  func.func @transform_0(%arg0: i32, %arg1: i32) -> (i32, i32) {
    %c1_i32 = arith.constant 1 : i32
    %0 = arith.muli %arg0, %c1_i32 : i32
    %1 = arith.addi %0, %arg1 : i32
    %c0_i32 = arith.constant 0 : i32
    %2 = arith.minsi %1, %c0_i32 : i32
    %c0_i32_0 = arith.constant 0 : i32
    %c0_i32_1 = arith.constant 0 : i32
    return %2, %c0_i32_0 : i32, i32
  }
  func.func @transform_1(%arg0: i32, %arg1: i32) -> (i32, i32) {
    %c1_i32 = arith.constant 1 : i32
    %0 = arith.muli %arg0, %c1_i32 : i32
    %1 = arith.addi %0, %arg1 : i32
    %c0_i32 = arith.constant 0 : i32
    %2 = arith.minsi %1, %c0_i32 : i32
    %c0_i32_0 = arith.constant 0 : i32
    %c0_i32_1 = arith.constant 0 : i32
    return %2, %c0_i32_0 : i32, i32
  }
  func.func @transform_2(%arg0: i32, %arg1: i32) -> (i32, i32, i32, i32) {
    %c0_i32 = arith.constant 0 : i32
    %c0_i32_0 = arith.constant 0 : i32
    %c0_i32_1 = arith.constant 0 : i32
    %c0_i32_2 = arith.constant 0 : i32
    return %arg0, %c0_i32, %c0_i32_0, %c0_i32_1 : i32, i32, i32, i32
  }
}

</mosaic_0001>

<llo_original>
// kernel: dice_bce_loss.1
$region0: #{dice_bce_loss.1}
  #allocation0 [shape = 'u32[]', space=smem, size = 0x4, offset = 0x4, fixed_abs, tag = 'smem constant byte address 0x4 - core index']
  #allocation1 [shape = 'u32[144,128]{1,0:T(1,128)}', space=vmem, size = 0x12000, scoped, tag = 'internal scratch']
  %s0 = inlined_call_operand.vmem [shape: f32[16,128], index: 0, kind: input, shape index: {}]
  %s1 = inlined_call_operand.vmem [shape: f32[16,128], index: 1, kind: input, shape index: {}]
  %s2 = inlined_call_operand.vmem [shape: f32[2,4,8,128], index: 2, kind: output, shape index: {}]
  %s3 = sld [smem:[#allocation0]]
  $region49: #{dice_bce_loss.1} parent=0
    _
  %s5 = ssub.s32 1, %s3
  %s6 = scalar_select 0, %s5, %s3
  loop: start=0, step=1, limit=4
  $region2: #{dice_bce_loss.1} parent=0 // loop_pre_header
    _
  $region3: #{dice_bce_loss.1} parent=0 // loop_header
    %s8 = sphi 0, %s12
    %p9 = scmp.ge.s32.totalorder %s8, 4
    %s15 = sphi 0, %s27
    %s16 = sphi 0, %s23
    %s17 = sphi 0, %s15
    %s18 = sphi 0, %s16
    %s19 = sphi 0, %s17
    %s20 = sphi 0, %s18
    %s36 = sphi 0, %s38
    %s39 = sphi 0, %s36
    %s40 = sphi 0, %s39
    %s56 = sphi 0, %s40
    %s68 = sphi 0, %s70
    %s71 = sphi 0, %s68
    %s72 = sphi 0, %s71
    %s88 = sphi 0, %s72
    %s94 = sphi 0, %s96
    %s97 = sphi 0, %s94
    %s98 = sphi 0, %s97
    %s114 = sphi 0, %s98
  $region4: #{dice_bce_loss.1} parent=0 // loop_header_branch
    %11 = sbr.rel (%p9) target = $region8
  $region5: #{dice_bce_loss.1} parent=0 // loop_body
    %s13 = ssub.s32 %s8, 1
    %s14 = ssub.s32 %s8, 2
    %s21 = sadd.s32 1, %s16
    %p22 = scmp.ge.s32.totalorder %s21, 1
    %s23 = scalar_select %p22, 0, %s21
    %s24 = sadd.s32 1, %s15
    %s25 = scalar_select %p22, %s24, %s15
    %p26 = scmp.ge.s32.totalorder %s25, 2
    %s27 = scalar_select %p26, 0, %s25
    %s28 = sadd.s32 %s15, %s16
    %p29 = scmp.lt.s32.totalorder %s28, 0
    %s30 = scalar_select %p29, %s28, 0
    %s31 = sadd.s32 %s27, %s23
    %p32 = scmp.lt.s32.totalorder %s31, 0
    %s33 = scalar_select %p32, %s31, 0
    %s34 = ssub.s32 %s30, %s33
    %p35 = scmp.eq.s32.totalorder %s34, 0
    %s37 = sadd.s32 %s36, 1
    %s38 = scalar_select %p35, %s36, %s37
    %p41 = pneg %p35
    %p42 = scmp.eq.s32.totalorder %s8, 1
    %p43 = por %p41, %p42
    %p44 = scmp.ne.s32.totalorder %s36, %s39
    %p45 = scmp.eq.s32.totalorder %s8, 0
    %p46 = por %p44, %p45
    %p47 = scmp.ne.s32.totalorder %s36, %s39
    %p48 = scmp.eq.s32.totalorder %s13, 1
    %p49 = por %p47, %p48
    %p50 = scmp.ne.s32.totalorder %s39, %s40
    %p51 = scmp.eq.s32.totalorder %s13, 0
    %p52 = por %p50, %p51
    %p53 = scmp.ne.s32.totalorder %s39, %s40
    %p54 = scmp.eq.s32.totalorder %s14, 1
    %p55 = por %p53, %p54
    %p57 = scmp.ne.s32.totalorder %s40, %s56
    %p58 = scmp.eq.s32.totalorder %s14, 0
    %p59 = por %p57, %p58
    %s60 = sadd.s32 %s15, %s16
    %p61 = scmp.lt.s32.totalorder %s60, 0
    %s62 = scalar_select %p61, %s60, 0
    %s63 = sadd.s32 %s27, %s23
    %p64 = scmp.lt.s32.totalorder %s63, 0
    %s65 = scalar_select %p64, %s63, 0
    %s66 = ssub.s32 %s62, %s65
    %p67 = scmp.eq.s32.totalorder %s66, 0
    %s69 = sadd.s32 %s68, 1
    %s70 = scalar_select %p67, %s68, %s69
    %p73 = pneg %p67
    %p74 = scmp.eq.s32.totalorder %s8, 1
    %p75 = por %p73, %p74
    %p76 = scmp.ne.s32.totalorder %s68, %s71
    %p77 = scmp.eq.s32.totalorder %s8, 0
    %p78 = por %p76, %p77
    %p79 = scmp.ne.s32.totalorder %s68, %s71
    %p80 = scmp.eq.s32.totalorder %s13, 1
    %p81 = por %p79, %p80
    %p82 = scmp.ne.s32.totalorder %s71, %s72
    %p83 = scmp.eq.s32.totalorder %s13, 0
    %p84 = por %p82, %p83
    %p85 = scmp.ne.s32.totalorder %s71, %s72
    %p86 = scmp.eq.s32.totalorder %s14, 1
    %p87 = por %p85, %p86
    %p89 = scmp.ne.s32.totalorder %s72, %s88
    %p90 = scmp.eq.s32.totalorder %s14, 0
    %p91 = por %p89, %p90
    %s92 = ssub.s32 %s15, %s27
    %p93 = scmp.eq.s32.totalorder %s92, 0
    %s95 = sadd.s32 %s94, 1
    %s96 = scalar_select %p93, %s94, %s95
    %p99 = pneg %p93
    %p100 = scmp.eq.s32.totalorder %s8, 1
    %p101 = por %p99, %p100
    %p102 = scmp.ne.s32.totalorder %s94, %s97
    %p103 = scmp.eq.s32.totalorder %s8, 0
    %p104 = por %p102, %p103
    %p105 = scmp.ne.s32.totalorder %s94, %s97
    %p106 = scmp.eq.s32.totalorder %s13, 1
    %p107 = por %p105, %p106
    %p108 = scmp.ne.s32.totalorder %s97, %s98
    %p109 = scmp.eq.s32.totalorder %s13, 0
    %p110 = por %p108, %p109
    %p111 = scmp.ne.s32.totalorder %s97, %s98
    %p112 = scmp.eq.s32.totalorder %s14, 1
    %p113 = por %p111, %p112
    %p115 = scmp.ne.s32.totalorder %s98, %s114
    %p116 = scmp.eq.s32.totalorder %s14, 0
    %p117 = por %p115, %p116
    %p118 = scmp.le.s32.totalorder 1, %s8
    %p119 = scmp.lt.s32.totalorder %s8, 3
    %p120 = pnand %p118, %p119
    %p121 = pneg %p120
    // Predicated region
    $region9: #{dice_bce_loss.1} parent=5 // pred_check
      _
    $region10: #{dice_bce_loss.1} parent=5 // pred_check_branch
      %123 = sbr.rel (%p120) target = $region12
    $region11: #{dice_bce_loss.1} parent=5 // pred_region
      %s124 = ssub.s32 %s8, 1
    $region12: #{dice_bce_loss.1} parent=5 // pred_fallthru
      _
    %p125 = scmp.lt.s32.totalorder %s8, 2
    // Predicated region
    $region13: #{dice_bce_loss.1} parent=5 // pred_check
      %p126 = pneg %p125
    $region14: #{dice_bce_loss.1} parent=5 // pred_check_branch
      %128 = sbr.rel (%p126) target = $region16
    $region15: #{dice_bce_loss.1} parent=5 // pred_region
      // Predicated region
      $region17: #{dice_bce_loss.1} parent=15 // pred_check
        %p129 = pneg %p46
      $region18: #{dice_bce_loss.1} parent=15 // pred_check_branch
        %131 = sbr.rel (%p129) target = $region20
      $region19: #{dice_bce_loss.1} parent=15 // pred_region
        %s132 = sadd.s32 %s15, %s16
        %p133 = scmp.lt.s32.totalorder %s132, 0
        %s134 = scalar_select %p133, %s132, 0
        %s135 = smul.u32 256, %s134
        %s136 = ssub.s32 2, %s135
        %s137 = smul.u32 128, %s136
        %p138 = scmp.lt.s32.totalorder %s135, 1
        %s139 = scalar_select %p138, %s135, 1
        %s140 = smul.addr %s139, 8
        %s141 = scalar_lea.vmem %s0, %s140
        %s142 = sadd.s32 %s15, %s16
        %p143 = scmp.lt.s32.totalorder %s142, 0
        %s144 = scalar_select %p143, %s142, 0
        %s145 = smul.u32 256, %s144
        %s146 = ssub.s32 2, %s145
        %s147 = smul.u32 128, %s146
      $region20: #{dice_bce_loss.1} parent=15 // pred_fallthru
        _
      // Predicated region
      $region21: #{dice_bce_loss.1} parent=15 // pred_check
        %p148 = pneg %p78
      $region22: #{dice_bce_loss.1} parent=15 // pred_check_branch
        %150 = sbr.rel (%p148) target = $region24
      $region23: #{dice_bce_loss.1} parent=15 // pred_region
        %s151 = sadd.s32 %s15, %s16
        %p152 = scmp.lt.s32.totalorder %s151, 0
        %s153 = scalar_select %p152, %s151, 0
        %s154 = smul.u32 256, %s153
        %s155 = ssub.s32 2, %s154
        %s156 = smul.u32 128, %s155
        %p157 = scmp.lt.s32.totalorder %s154, 1
        %s158 = scalar_select %p157, %s154, 1
        %s159 = smul.addr %s158, 8
        %s160 = scalar_lea.vmem %s1, %s159
        %s161 = sadd.s32 %s15, %s16
        %p162 = scmp.lt.s32.totalorder %s161, 0
        %s163 = scalar_select %p162, %s161, 0
        %s164 = smul.u32 256, %s163
        %s165 = ssub.s32 2, %s164
        %s166 = smul.u32 128, %s165
      $region24: #{dice_bce_loss.1} parent=15 // pred_fallthru
        _
    $region16: #{dice_bce_loss.1} parent=5 // pred_fallthru
      _
    %p167 = scmp.le.s32.totalorder 1, %s8
    %p168 = scmp.lt.s32.totalorder %s8, 3
    %p169 = pnand %p167, %p168
    %p170 = pneg %p169
    // Predicated region
    $region25: #{dice_bce_loss.1} parent=5 // pred_check
      _
    $region26: #{dice_bce_loss.1} parent=5 // pred_check_branch
      %172 = sbr.rel (%p169) target = $region28
    $region27: #{dice_bce_loss.1} parent=5 // pred_region
      %s173 = ssub.s32 %s8, 1
      %s174 = sadd.s32 %s17, %s18
      %p175 = scmp.lt.s32.totalorder %s174, 0
      %s176 = scalar_select %p175, %s174, 0
      %s177 = smul.u32 256, %s176
      %s178 = ssub.s32 2, %s177
      %s179 = smul.u32 128, %s178
      %p180 = scmp.lt.s32.totalorder %s177, 1
      %s181 = scalar_select %p180, %s177, 1
      %s182 = smul.addr %s181, 8
      %s183 = scalar_lea.vmem %s0, %s182
      %p184 = pneg %p52
      %p185 = pneg %p49
      %s186 = sadd.s32 %s17, %s18
      %p187 = scmp.lt.s32.totalorder %s186, 0
      %s188 = scalar_select %p187, %s186, 0
      %s189 = smul.u32 256, %s188
      %s190 = ssub.s32 2, %s189
      %s191 = smul.u32 128, %s190
      %p192 = scmp.lt.s32.totalorder %s189, 1
      %s193 = scalar_select %p192, %s189, 1
      %s194 = smul.addr %s193, 8
      %s195 = scalar_lea.vmem %s1, %s194
      %p196 = pneg %p84
      %p197 = pneg %p81
      %p198 = pneg %p110
      %p199 = pneg %p107
      %p200 = scmp.lt.s32.totalorder %s17, 1
      %s201 = scalar_select %p200, %s17, 1
      %s202 = smul.addr %s201, 4
      %s203 = smul.addr %s202, 8
      %s204 = scalar_lea.vmem %s2, %s203
      %s205 = sadd.s32 %s17, %s18
      %p206 = scmp.lt.s32.totalorder %s205, 0
      %s207 = scalar_select %p206, %s205, 0
      %s208 = smul.u32 256, %s207
      %s209 = ssub.s32 2, %s208
      %s210 = smul.u32 128, %s209
      %p211 = scmp.lt.s32.totalorder %s208, 1
      %s212 = scalar_select %p211, %s208, 1
      %s213 = smul.addr %s212, 8
      %s214 = scalar_lea.vmem %s0, %s213
      %s215 = sadd.s32 %s17, %s18
      %p216 = scmp.lt.s32.totalorder %s215, 0
      %s217 = scalar_select %p216, %s215, 0
      %s218 = smul.u32 256, %s217
      %s219 = ssub.s32 2, %s218
      %s220 = smul.u32 128, %s219
      %s221 = sadd.s32 %s17, %s18
      %p222 = scmp.lt.s32.totalorder %s221, 0
      %s223 = scalar_select %p222, %s221, 0
      %s224 = smul.u32 256, %s223
      %s225 = ssub.s32 2, %s224
      %s226 = smul.u32 128, %s225
      %p227 = scmp.lt.s32.totalorder %s224, 1
      %s228 = scalar_select %p227, %s224, 1
      %s229 = smul.addr %s228, 8
      %s230 = scalar_lea.vmem %s1, %s229
      %s231 = sadd.s32 %s17, %s18
      %p232 = scmp.lt.s32.totalorder %s231, 0
      %s233 = scalar_select %p232, %s231, 0
      %s234 = smul.u32 256, %s233
      %s235 = ssub.s32 2, %s234
      %s236 = smul.u32 128, %s235
      %p237 = scmp.lt.s32.totalorder %s17, 1
      %s238 = scalar_select %p237, %s17, 1
      %s239 = smul.addr %s238, 4
      %s240 = smul.addr %s239, 8
      %s241 = scalar_lea.vmem %s2, %s240
      %s242 = sadd.s32 %s17, %s18
      %p243 = scmp.eq.s32.totalorder %s18, 0
      // Predicated region
      $region29: #{dice_bce_loss.1} parent=27 // pred_check
        %p244 = pneg %p243
      $region30: #{dice_bce_loss.1} parent=27 // pred_check_branch
        %246 = sbr.rel (%p244) target = $region32
      $region31: #{dice_bce_loss.1} parent=27 // pred_region
        %247 = vst [vmem:[%s241] sm:$0xff] 0.0
        %248 = vst [vmem:[%s241 + $0x8] sm:$0xff] 0.0
        %249 = vst [vmem:[%s241 + $0x10] sm:$0xff] 0.0
        %250 = vst [vmem:[%s241 + $0x18] sm:$0xff] 0.0
      $region32: #{dice_bce_loss.1} parent=27 // pred_fallthru
        _
      %p251 = scmp.eq.s32.totalorder %s242, 0
      // Predicated region
      $region33: #{dice_bce_loss.1} parent=27 // pred_check
        %p252 = pneg %p251
      $region34: #{dice_bce_loss.1} parent=27 // pred_check_branch
        %254 = sbr.rel (%p252) target = $region36
      $region35: #{dice_bce_loss.1} parent=27 // pred_region
        %v255 = vld [vmem:[%s214] sm:$0xff]
        %v256 = vld [vmem:[%s214 + $0x8] sm:$0xff]
        %v257 = vld [vmem:[%s214 + $0x10] sm:$0xff]
        %v258 = vld [vmem:[%s214 + $0x18] sm:$0xff]
        %v259 = vld [vmem:[%s214 + $0x20] sm:$0xff]
        %v260 = vld [vmem:[%s214 + $0x28] sm:$0xff]
        %v261 = vld [vmem:[%s214 + $0x30] sm:$0xff]
        %v262 = vld [vmem:[%s214 + $0x38] sm:$0xff]
        %v263 = vld [vmem:[%s230] sm:$0xff]
        %v264 = vld [vmem:[%s230 + $0x8] sm:$0xff]
        %v265 = vld [vmem:[%s230 + $0x10] sm:$0xff]
        %v266 = vld [vmem:[%s230 + $0x18] sm:$0xff]
        %v267 = vld [vmem:[%s230 + $0x20] sm:$0xff]
        %v268 = vld [vmem:[%s230 + $0x28] sm:$0xff]
        %v269 = vld [vmem:[%s230 + $0x30] sm:$0xff]
        %v270 = vld [vmem:[%s230 + $0x38] sm:$0xff]
        %v271 = vmax.f32 %v255, -100.0
        %v272 = vmax.f32 %v256, -100.0
        %v273 = vmax.f32 %v257, -100.0
        %v274 = vmax.f32 %v258, -100.0
        %v275 = vmax.f32 %v259, -100.0
        %v276 = vmax.f32 %v260, -100.0
        %v277 = vmax.f32 %v261, -100.0
        %v278 = vmax.f32 %v262, -100.0
        %v279 = vmin.f32 %v271, 100.0
        %v280 = vmin.f32 %v272, 100.0
        %v281 = vmin.f32 %v273, 100.0
        %v282 = vmin.f32 %v274, 100.0
        %v283 = vmin.f32 %v275, 100.0
        %v284 = vmin.f32 %v276, 100.0
        %v285 = vmin.f32 %v277, 100.0
        %v286 = vmin.f32 %v278, 100.0
        %v287 = vand.u32 2147483647, %v279
        %v288 = vand.u32 2147483647, %v280
        %v289 = vand.u32 2147483647, %v281
        %v290 = vand.u32 2147483647, %v282
        %v291 = vand.u32 2147483647, %v283
        %v292 = vand.u32 2147483647, %v284
        %v293 = vand.u32 2147483647, %v285
        %v294 = vand.u32 2147483647, %v286
        %v295 = vsub.f32 0.0, %v287
        %v296 = vsub.f32 0.0, %v288
        %v297 = vsub.f32 0.0, %v289
        %v298 = vsub.f32 0.0, %v290
        %v299 = vsub.f32 0.0, %v291
        %v300 = vsub.f32 0.0, %v292
        %v301 = vsub.f32 0.0, %v293
        %v302 = vsub.f32 0.0, %v294
        %v303 = vmul.f32 %v295, 1.442695
        %v304 = vpow.pop %v303
        %v305 = vmul.f32 %v296, 1.442695
        %v306 = vpow.pop %v305
        %v307 = vmul.f32 %v297, 1.442695
        %v308 = vpow.pop %v307
        %v309 = vmul.f32 %v298, 1.442695
        %v310 = vpow.pop %v309
        %v311 = vmul.f32 %v299, 1.442695
        %v312 = vpow.pop %v311
        %v313 = vmul.f32 %v300, 1.442695
        %v314 = vpow.pop %v313
        %v315 = vmul.f32 %v301, 1.442695
        %v316 = vpow.pop %v315
        %v317 = vmul.f32 %v302, 1.442695
        %v318 = vpow.pop %v317
        %v319 = vadd.f32 %v304, 1.0
        %v320 = vadd.f32 %v306, 1.0
        %v321 = vadd.f32 %v308, 1.0
        %v322 = vadd.f32 %v310, 1.0
        %v323 = vadd.f32 %v312, 1.0
        %v324 = vadd.f32 %v314, 1.0
        %v325 = vadd.f32 %v316, 1.0
        %v326 = vadd.f32 %v318, 1.0
        %v327 = vlog2.pop %v319
        %v328 = vmul.f32 %v327, 0.6931472
        %v329 = vlog2.pop %v320
        %v330 = vmul.f32 %v329, 0.6931472
        %v331 = vlog2.pop %v321
        %v332 = vmul.f32 %v331, 0.6931472
        %v333 = vlog2.pop %v322
        %v334 = vmul.f32 %v333, 0.6931472
        %v335 = vlog2.pop %v323
        %v336 = vmul.f32 %v335, 0.6931472
        %v337 = vlog2.pop %v324
        %v338 = vmul.f32 %v337, 0.6931472
        %v339 = vlog2.pop %v325
        %v340 = vmul.f32 %v339, 0.6931472
        %v341 = vlog2.pop %v326
        %v342 = vmul.f32 %v341, 0.6931472
        %v343 = vmax.f32 %v279, 0.0
        %v344 = vmax.f32 %v280, 0.0
        %v345 = vmax.f32 %v281, 0.0
        %v346 = vmax.f32 %v282, 0.0
        %v347 = vmax.f32 %v283, 0.0
        %v348 = vmax.f32 %v284, 0.0
        %v349 = vmax.f32 %v285, 0.0
        %v350 = vmax.f32 %v286, 0.0
        %v351 = vmul.f32 %v279, %v263
        %v352 = vmul.f32 %v280, %v264
        %v353 = vmul.f32 %v281, %v265
        %v354 = vmul.f32 %v282, %v266
        %v355 = vmul.f32 %v283, %v267
        %v356 = vmul.f32 %v284, %v268
        %v357 = vmul.f32 %v285, %v269
        %v358 = vmul.f32 %v286, %v270
        %v359 = vsub.f32 %v343, %v351
        %v360 = vsub.f32 %v344, %v352
        %v361 = vsub.f32 %v345, %v353
        %v362 = vsub.f32 %v346, %v354
        %v363 = vsub.f32 %v347, %v355
        %v364 = vsub.f32 %v348, %v356
        %v365 = vsub.f32 %v349, %v357
        %v366 = vsub.f32 %v350, %v358
        %v367 = vadd.f32 %v359, %v328
        %v368 = vadd.f32 %v360, %v330
        %v369 = vadd.f32 %v361, %v332
        %v370 = vadd.f32 %v362, %v334
        %v371 = vadd.f32 %v363, %v336
        %v372 = vadd.f32 %v364, %v338
        %v373 = vadd.f32 %v365, %v340
        %v374 = vadd.f32 %v366, %v342
        %v375 = vsub.f32 %v279, %v343
        %v376 = vsub.f32 %v280, %v344
        %v377 = vsub.f32 %v281, %v345
        %v378 = vsub.f32 %v282, %v346
        %v379 = vsub.f32 %v283, %v347
        %v380 = vsub.f32 %v284, %v348
        %v381 = vsub.f32 %v285, %v349
        %v382 = vsub.f32 %v286, %v350
        %v383 = vsub.f32 %v375, %v328
        %v384 = vsub.f32 %v376, %v330
        %v385 = vsub.f32 %v377, %v332
        %v386 = vsub.f32 %v378, %v334
        %v387 = vsub.f32 %v379, %v336
        %v388 = vsub.f32 %v380, %v338
        %v389 = vsub.f32 %v381, %v340
        %v390 = vsub.f32 %v382, %v342
        %v391 = vmul.f32 %v383, 1.442695
        %v392 = vpow.pop %v391
        %v393 = vmul.f32 %v384, 1.442695
        %v394 = vpow.pop %v393
        %v395 = vmul.f32 %v385, 1.442695
        %v396 = vpow.pop %v395
        %v397 = vmul.f32 %v386, 1.442695
        %v398 = vpow.pop %v397
        %v399 = vmul.f32 %v387, 1.442695
        %v400 = vpow.pop %v399
        %v401 = vmul.f32 %v388, 1.442695
        %v402 = vpow.pop %v401
        %v403 = vmul.f32 %v389, 1.442695
        %v404 = vpow.pop %v403
        %v405 = vmul.f32 %v390, 1.442695
        %v406 = vpow.pop %v405
        %v407 = vlaneseq
        %v408 = vshrl.u32 %v407, 7
        %v409 = vadd.s32 %v408, 8
        %v410 = vadd.s32 %v408, 16
        %v411 = vadd.s32 %v408, 24
        %v412 = vadd.s32 %v408, 32
        %v413 = vadd.s32 %v408, 40
        %v414 = vadd.s32 %v408, 48
        %v415 = vadd.s32 %v408, 56
        %vm416 = vcmp.lt.s32.totalorder %v408, 16
        %vm417 = vcmp.lt.s32.totalorder %v409, 16
        %vm418 = vcmp.lt.s32.totalorder %v410, 16
        %vm419 = vcmp.lt.s32.totalorder %v411, 16
        %vm420 = vcmp.lt.s32.totalorder %v412, 16
        %vm421 = vcmp.lt.s32.totalorder %v413, 16
        %vm422 = vcmp.lt.s32.totalorder %v414, 16
        %vm423 = vcmp.lt.s32.totalorder %v415, 16
        %v424 = vsel %vm416, %v392, 0.0
        %v425 = vsel %vm417, %v394, 0.0
        %v426 = vsel %vm418, %v396, 0.0
        %v427 = vsel %vm419, %v398, 0.0
        %v428 = vsel %vm420, %v400, 0.0
        %v429 = vsel %vm421, %v402, 0.0
        %v430 = vsel %vm422, %v404, 0.0
        %v431 = vsel %vm423, %v406, 0.0
        %v432 = vsel %vm416, %v263, 0.0
        %v433 = vsel %vm417, %v264, 0.0
        %v434 = vsel %vm418, %v265, 0.0
        %v435 = vsel %vm419, %v266, 0.0
        %v436 = vsel %vm420, %v267, 0.0
        %v437 = vsel %vm421, %v268, 0.0
        %v438 = vsel %vm422, %v269, 0.0
        %v439 = vsel %vm423, %v270, 0.0
        %v440 = vsel %vm416, %v367, 0.0
        %v441 = vsel %vm417, %v368, 0.0
        %v442 = vsel %vm418, %v369, 0.0
        %v443 = vsel %vm419, %v370, 0.0
        %v444 = vsel %vm420, %v371, 0.0
        %v445 = vsel %vm421, %v372, 0.0
        %v446 = vsel %vm422, %v373, 0.0
        %v447 = vsel %vm423, %v374, 0.0
        %v448 = vmul.f32 %v424, %v432
        %v449 = vmul.f32 %v425, %v433
        %v450 = vmul.f32 %v426, %v434
        %v451 = vmul.f32 %v427, %v435
        %v452 = vmul.f32 %v428, %v436
        %v453 = vmul.f32 %v429, %v437
        %v454 = vmul.f32 %v430, %v438
        %v455 = vmul.f32 %v431, %v439
        %v456 = vadd.f32 %v448, %v449
        %v457 = vadd.f32 %v456, %v450
        %v458 = vadd.f32 %v457, %v451
        %v459 = vadd.f32 %v458, %v452
        %v460 = vadd.f32 %v459, %v453
        %v461 = vadd.f32 %v460, %v454
        %v462 = vadd.f32 %v461, %v455
        %v463 = vadd.f32 %v462, 0.0
        %v464 = vadd.f32 %v424, %v425
        %v465 = vadd.f32 %v464, %v426
        %v466 = vadd.f32 %v465, %v427
        %v467 = vadd.f32 %v466, %v428
        %v468 = vadd.f32 %v467, %v429
        %v469 = vadd.f32 %v468, %v430
        %v470 = vadd.f32 %v469, %v431
        %v471 = vadd.f32 %v470, 0.0
        %v472 = vadd.f32 %v432, %v433
        %v473 = vadd.f32 %v472, %v434
        %v474 = vadd.f32 %v473, %v435
        %v475 = vadd.f32 %v474, %v436
        %v476 = vadd.f32 %v475, %v437
        %v477 = vadd.f32 %v476, %v438
        %v478 = vadd.f32 %v477, %v439
        %v479 = vadd.f32 %v478, 0.0
        %v480 = vadd.f32 %v440, %v441
        %v481 = vadd.f32 %v480, %v442
        %v482 = vadd.f32 %v481, %v443
        %v483 = vadd.f32 %v482, %v444
        %v484 = vadd.f32 %v483, %v445
        %v485 = vadd.f32 %v484, %v446
        %v486 = vadd.f32 %v485, %v447
        %v487 = vadd.f32 %v486, 0.0
        %v488 = vld [vmem:[%s241] sm:$0xff]
        %v489 = vadd.f32 %v488, %v463
        %490 = vst [vmem:[%s241] sm:$0xff] %v489
        %s491 = scalar_lea.vmem %s241, 8
        %v492 = vld [vmem:[%s491] sm:$0xff]
        %v493 = vadd.f32 %v492, %v471
        %494 = vst [vmem:[%s491] sm:$0xff] %v493
        %s495 = scalar_lea.vmem %s241, 16
        %v496 = vld [vmem:[%s495] sm:$0xff]
        %v497 = vadd.f32 %v496, %v479
        %498 = vst [vmem:[%s495] sm:$0xff] %v497
        %s499 = scalar_lea.vmem %s241, 24
        %v500 = vld [vmem:[%s499] sm:$0xff]
        %v501 = vadd.f32 %v500, %v487
        %502 = vst [vmem:[%s499] sm:$0xff] %v501
      $region36: #{dice_bce_loss.1} parent=27 // pred_fallthru
        _
      %p503 = scmp.lt.s32.totalorder %s17, 1
      %s504 = scalar_select %p503, %s17, 1
      %s505 = smul.addr %s504, 4
      %s506 = smul.addr %s505, 8
      %s507 = scalar_lea.vmem %s2, %s506
      // Predicated region
      $region37: #{dice_bce_loss.1} parent=27 // pred_check
        %p508 = pneg %p107
      $region38: #{dice_bce_loss.1} parent=27 // pred_check_branch
        %510 = sbr.rel (%p508) target = $region40
      $region39: #{dice_bce_loss.1} parent=27 // pred_region
        _
      $region40: #{dice_bce_loss.1} parent=27 // pred_fallthru
        _
    $region28: #{dice_bce_loss.1} parent=5 // pred_fallthru
      _
    %p511 = scmp.le.s32.totalorder 2, %s8
    // Predicated region
    $region41: #{dice_bce_loss.1} parent=5 // pred_check
      %p512 = pneg %p511
    $region42: #{dice_bce_loss.1} parent=5 // pred_check_branch
      %514 = sbr.rel (%p512) target = $region44
    $region43: #{dice_bce_loss.1} parent=5 // pred_region
      %s515 = ssub.s32 %s8, 2
      // Predicated region
      $region45: #{dice_bce_loss.1} parent=43 // pred_check
        %p516 = pneg %p113
      $region46: #{dice_bce_loss.1} parent=43 // pred_check_branch
        %518 = sbr.rel (%p516) target = $region48
      $region47: #{dice_bce_loss.1} parent=43 // pred_region
        %p519 = scmp.lt.s32.totalorder %s19, 1
        %s520 = scalar_select %p519, %s19, 1
        %s521 = smul.addr %s520, 4
        %s522 = smul.addr %s521, 8
        %s523 = scalar_lea.vmem %s2, %s522
      $region48: #{dice_bce_loss.1} parent=43 // pred_fallthru
        _
    $region44: #{dice_bce_loss.1} parent=5 // pred_fallthru
      _
  $region6: #{dice_bce_loss.1} parent=0 // loop_footer
    %s12 = sadd.s32 1, %s8
  $region7: #{dice_bce_loss.1} parent=0 // loop_footer_branch
    %7 = sbr.rel target = $region3
  $region8: #{dice_bce_loss.1} parent=0 // loop_exit
    _

</llo_original>
